<compile_context>
chip_gen: v5e
topology: v5e:2x2
jax: 0.10.0
libtpu: 0.0.40
codegen_flags: <defaults>
</compile_context>

<pallas_src>
import math

import jax
import jax.numpy as jnp
import numpy as np
from jax.experimental import pallas as pl
from jax.experimental.pallas import tpu as pltpu


def _round_up(a: int, b: int) -> int:
    return (a + b - 1) // b * b


def make_pe_table(d_model: int, max_len: int = 100, pad_rows_to: int = 128) -> jnp.ndarray:
    """Deterministic sinusoidal table, identical to the module __init__.

    Rows are zero-padded up to a multiple of `pad_rows_to` (default 128) so
    the MXU contraction dimension of the gather kernel is aligned. Indices
    must be in [0, max_len) as in the PyTorch module.
    """
    position = np.arange(0, max_len, dtype=np.float32)[:, None]           # (max_len, 1)
    div_term = np.exp(
        np.arange(0, d_model, 2, dtype=np.float32) * -(math.log(10000.0) / d_model)
    )                                                                      # (d_model/2,)
    pe = np.zeros((max_len, d_model), dtype=np.float32)
    pe[:, 0::2] = np.sin(position * div_term)
    pe[:, 1::2] = np.cos(position * div_term)
    rows_padded = _round_up(max_len, pad_rows_to)
    if rows_padded != max_len:
        pe = np.concatenate(
            [pe, np.zeros((rows_padded - max_len, d_model), dtype=np.float32)], axis=0
        )
    return jnp.asarray(pe)


def _pe_gather_kernel(idx_ref, pe_ref, out_ref):
    # idx_ref: (TILE_N, 1)        int32  — column layout: lane-broadcast is free
    # pe_ref : (K_pad, d_model)   float32 — full (padded) table, resident in VMEM
    # out_ref: (TILE_N, d_model)  float32
    tile_n = out_ref.shape[0]
    k_pad = pe_ref.shape[0]
    idx = idx_ref[...]                                                    # (TILE_N, 1)
    col_iota = jax.lax.broadcasted_iota(jnp.int32, (tile_n, k_pad), 1)    # (TILE_N, K)
    onehot = (col_iota == idx).astype(jnp.float32)                        # VPU compare
    out_ref[...] = jnp.dot(onehot, pe_ref[...],
                           preferred_element_type=jnp.float32)            # MXU gather


def positional_encoding(x: jnp.ndarray, pe: jnp.ndarray, *, max_tile_n: int = 256) -> jnp.ndarray:
    """x: (bsize, sqlen) integer indices; pe: (K_pad, d_model) float32 table.

    Returns (bsize, sqlen, d_model) float32 — same as the PyTorch module.
    """
    bsize, sqlen = x.shape
    k_rows, d_model = pe.shape

    # Align the contraction (table-row) dimension to 128 lanes if needed.
    k_pad = _round_up(k_rows, 128)
    if k_pad != k_rows:
        pe = jnp.pad(pe, ((0, k_pad - k_rows), (0, 0)))

    n = bsize * sqlen
    # Tile over rows: multiple of 8, capped at max_tile_n (multiple of 128/256
    # MXU widths for large N); tiny inputs get a single minimal tile.
    tile_n = _round_up(min(max_tile_n, _round_up(n, 8)), 8)
    n_pad = _round_up(n, tile_n)
    num_tiles = n_pad // tile_n

    y = x.reshape(n).astype(jnp.int32)
    if n_pad != n:
        y = jnp.pad(y, (0, n_pad - n))          # padded rows gather row 0; sliced off below
    y = y.reshape(n_pad, 1)                     # column layout for free lane-broadcast

    cost = pl.CostEstimate(
        flops=2 * n_pad * k_pad * d_model,
        transcendentals=0,
        bytes_accessed=n_pad * 4 + n_pad * d_model * 4 + k_pad * d_model * 4,
    )

    out_flat = pl.pallas_call(
        _pe_gather_kernel,
        out_shape=jax.ShapeDtypeStruct((n_pad, d_model), jnp.float32),
        grid=(num_tiles,),
        in_specs=[
            pl.BlockSpec((tile_n, 1), lambda i: (i, 0)),            # index column per tile
            pl.BlockSpec((k_pad, d_model), lambda i: (0, 0)),       # pe table, resident
        ],
        out_specs=pl.BlockSpec((tile_n, d_model), lambda i: (i, 0)),
        compiler_params=pltpu.CompilerParams(
            dimension_semantics=("parallel",),                      # megacore shard on v7x
        ),
        cost_estimate=cost,
    )(y, pe)

    return out_flat[:n].reshape(bsize, sqlen, d_model)


if __name__ == "__main__":
    d_model = 32
    max_len = 100

    pe = make_pe_table(d_model, max_len)        # (128, 32), rows >= max_len are zero
    key = jax.random.PRNGKey(0)

    # Small case (matches module usage: batch=2, seq=8) — single tile.
    bsize, sqlen = 2, 8
    x = jax.random.randint(key, (bsize, sqlen), 0, max_len, dtype=jnp.int32)
    out = jax.block_until_ready(positional_encoding(x, pe))
    ref = jnp.take(pe, x.reshape(-1), axis=0).reshape(bsize, sqlen, d_model)
    assert out.shape == (bsize, sqlen, d_model)
    assert out.dtype == jnp.float32
    np.testing.assert_allclose(np.asarray(out), np.asarray(ref), rtol=1e-6, atol=1e-6)

    # Larger case exercising the multi-tile grid + ragged-N padding path.
    bsize2, sqlen2 = 4, 200                      # n=800 -> padded to 1024, grid=(4,)
    x2 = jax.random.randint(jax.random.PRNGKey(1), (bsize2, sqlen2), 0, max_len,
                            dtype=jnp.int32)
    out2 = jax.block_until_ready(positional_encoding(x2, pe))
    ref2 = jnp.take(pe, x2.reshape(-1), axis=0).reshape(bsize2, sqlen2, d_model)
    np.testing.assert_allclose(np.asarray(out2), np.asarray(ref2), rtol=1e-6, atol=1e-6)

    print("KERNEL_OK")
</pallas_src>

<mosaic_0001>
module attributes {stable_mosaic.version = 11 : i64} {
  func.func @_pe_gather_kernel(%arg0: i32, %arg1: memref<16x1xi32, #tpu.memory_space<vmem>>, %arg2: memref<128x32xf32, #tpu.memory_space<vmem>>, %arg3: memref<16x32xf32, #tpu.memory_space<vmem>>) attributes {dimension_semantics = [#tpu.dimension_semantics<parallel>], iteration_bounds = array<i64: 1>, scalar_prefetch = 0 : i64, scratch_operands = 0 : i64, tpu.core_type = #tpu.core_type<tc>, window_params = [{transform_indices = @transform_0, window_bounds = array<i64: 16, 1>}, {pipeline_mode = #tpu.pipeline_mode<synchronous>, transform_indices = @transform_1, window_bounds = array<i64: 128, 32>}, {transform_indices = @transform_2, window_bounds = array<i64: 16, 32>}]} {
    %c0 = arith.constant 0 : index
    %c0_0 = arith.constant 0 : index
    %0 = vector.load %arg1[%c0, %c0_0] : memref<16x1xi32, #tpu.memory_space<vmem>>, vector<16x1xi32>
    %1 = tpu.iota {dimensions = array<i32: 1>} : vector<16x128xi32>
    %2 = vector.broadcast %0 : vector<16x1xi32> to vector<16x128xi32>
    %3 = arith.cmpi eq, %1, %2 : vector<16x128xi32>
    %4 = arith.extui %3 : vector<16x128xi1> to vector<16x128xi32>
    %5 = arith.sitofp %4 : vector<16x128xi32> to vector<16x128xf32>
    %c0_1 = arith.constant 0 : index
    %c0_2 = arith.constant 0 : index
    %6 = vector.load %arg2[%c0_1, %c0_2] : memref<128x32xf32, #tpu.memory_space<vmem>>, vector<128x32xf32>
    %cst = arith.constant dense<0.000000e+00> : vector<16x32xf32>
    %7 = tpu.matmul %5, %6, %cst {dimension_numbers = #tpu.dot_dimension_numbers<[1], [0], [0], [1], [0, 0, 1, 1], [], []>} : vector<16x128xf32>, vector<128x32xf32>, vector<16x32xf32> -> vector<16x32xf32>
    %c0_3 = arith.constant 0 : index
    %c0_4 = arith.constant 0 : index
    %8 = vector.load %arg3[%c0_3, %c0_4] : memref<16x32xf32, #tpu.memory_space<vmem>>, vector<16x32xf32>
    tpu.vector_store %arg3[%c0_3, %c0_4], %7 {strides = array<i32>} : memref<16x32xf32, #tpu.memory_space<vmem>>, vector<16x32xf32>,
    return
  }
  func.func @transform_0(%arg0: i32) -> (i32, i32) {
    %c0_i32 = arith.constant 0 : i32
    %c0_i32_0 = arith.constant 0 : i32
    return %arg0, %c0_i32 : i32, i32
  }
  func.func @transform_1(%arg0: i32) -> (i32, i32) {
    %c0_i32 = arith.constant 0 : i32
    %c0_i32_0 = arith.constant 0 : i32
    %c0_i32_1 = arith.constant 0 : i32
    return %c0_i32, %c0_i32_0 : i32, i32
  }
  func.func @transform_2(%arg0: i32) -> (i32, i32) {
    %c0_i32 = arith.constant 0 : i32
    %c0_i32_0 = arith.constant 0 : i32
    return %arg0, %c0_i32 : i32, i32
  }
}

</mosaic_0001>

<llo_original>
// kernel: tpu_custom_call.1
$region0: #{tpu_custom_call.1}
  #allocation0 [shape = 'u32[]', space=smem, size = 0x4, offset = 0x4, fixed_abs, tag = 'smem constant byte address 0x4 - core index']
  #allocation1 [shape = 'u32[72,128]{1,0:T(1,128)}', space=vmem, size = 0x9000, scoped, tag = 'internal scratch']
  %s0 = inlined_call_operand.vmem [shape: s32[16,1], index: 0, kind: input, shape index: {}]
  %s1 = inlined_call_operand.vmem [shape: f32[128,32], index: 1, kind: input, shape index: {}]
  %s2 = inlined_call_operand.hbm [shape: f32[16,32], index: 2, kind: output, shape index: {}]
  %s3 = sld [smem:[#allocation0]]
  $region18: #{tpu_custom_call.1} parent=0
    _
  %s5 = ssub.s32 1, %s3
  %s6 = scalar_select 0, %s5, %s3
  $region1: #{tpu_custom_call.1} parent=0
    #allocation2 [shape = 'u8[8192]{0}', space=vmem, size = 0x2000, scoped, tag = 'output window, operand 0, single buffered']
    #allocation3 [shape = 's32[1]{0}', space=sflag, size = 0x4, scoped, tag = 'scoped memory for tpu_custom_call.1']
    %7 = vsyncpa [#allocation3], 0
    // Predicated region
    $region2: #{tpu_custom_call.1} parent=1 // pred_check
      _
    $region3: #{tpu_custom_call.1} parent=1 // pred_check_branch
      %9 = sbr.rel (0) target = $region5
    $region4: #{tpu_custom_call.1} parent=1 // pred_region
      _
    $region5: #{tpu_custom_call.1} parent=1 // pred_fallthru
      _
    // Predicated region
    $region6: #{tpu_custom_call.1} parent=1 // pred_check
      _
    $region7: #{tpu_custom_call.1} parent=1 // pred_check_branch
      %11 = sbr.rel (0) target = $region9
    $region8: #{tpu_custom_call.1} parent=1 // pred_region
      _
    $region9: #{tpu_custom_call.1} parent=1 // pred_fallthru
      _
    %v12 = vld [vmem:[%s0] sm:$0xff]
    %v13 = vld [vmem:[%s0 + $0x8] sm:$0xff]
    %v14 = vlaneseq
    %v15 = vand.u32 %v14, 127
    %16 = vset.pattern.permute.xlu0 0
    %17 = vperm.xlu0 %16, %v12
    %v18 = vpop.permute.xlu0 %17
    %19 = vset.pattern.permute.xlu0 0
    %20 = vperm.xlu0 %19, %v13
    %v21 = vpop.permute.xlu0 %20
    %vm22 = vcmp.eq.s32.totalorder %v15, %v18
    %vm23 = vcmp.eq.s32.totalorder %v15, %v21
    %v24 = vsel %vm22, 1, 0
    %v25 = vsel %vm23, 1, 0
    %v26 = vcvt.s32.f32 %v24
    %v27 = vcvt.s32.f32 %v25
    %v28 = vld [vmem:[%s1] sm:$0xff]
    %v29 = vld [vmem:[%s1 + $0x8] sm:$0xff]
    %v30 = vld [vmem:[%s1 + $0x10] sm:$0xff]
    %v31 = vld [vmem:[%s1 + $0x18] sm:$0xff]
    %v32 = vld [vmem:[%s1 + $0x20] sm:$0xff]
    %v33 = vld [vmem:[%s1 + $0x28] sm:$0xff]
    %v34 = vld [vmem:[%s1 + $0x30] sm:$0xff]
    %v35 = vld [vmem:[%s1 + $0x38] sm:$0xff]
    %v36 = vld [vmem:[%s1 + $0x40] sm:$0xff]
    %v37 = vld [vmem:[%s1 + $0x48] sm:$0xff]
    %v38 = vld [vmem:[%s1 + $0x50] sm:$0xff]
    %v39 = vld [vmem:[%s1 + $0x58] sm:$0xff]
    %v40 = vld [vmem:[%s1 + $0x60] sm:$0xff]
    %v41 = vld [vmem:[%s1 + $0x68] sm:$0xff]
    %v42 = vld [vmem:[%s1 + $0x70] sm:$0xff]
    %v43 = vld [vmem:[%s1 + $0x78] sm:$0xff]
    %44 = vmatpush.msra.mxu0 %v43
    %45 = vmatpush.msra.mxu0 %v42
    %46 = vmatpush.msra.mxu0 %v41
    %47 = vmatpush.msra.mxu0 %v40
    %48 = vmatpush.msra.mxu0 %v39
    %49 = vmatpush.msra.mxu0 %v38
    %50 = vmatpush.msra.mxu0 %v37
    %51 = vmatpush.msra.mxu0 %v36
    %52 = vmatpush.msra.mxu0 %v35
    %53 = vmatpush.msra.mxu0 %v34
    %54 = vmatpush.msra.mxu0 %v33
    %55 = vmatpush.msra.mxu0 %v32
    %56 = vmatpush.msra.mxu0 %v31
    %57 = vmatpush.msra.mxu0 %v30
    %58 = vmatpush.msra.mxu0 %v29
    %59 = vmatpush.msra.mxu0 %v28
    %60 = vmatmul.f32.gmra.mxu0 %v26
    %v61 = vpop.f32.mrf.mxu0
    %v62 = vadd.f32 0.0, %v61
    %63 = vmatmul.f32.gmra.mxu0 %v27
    %v64 = vpop.f32.mrf.mxu0
    %v65 = vadd.f32 0.0, %v64
    %66 = vdwg.mxu0
    %vm67 = vcmask 261120
    %68 = vst.msk [vmem:[#allocation2] sm:$0xff] %vm67, %v62
    %69 = vst.msk [vmem:[#allocation2 + $0x8] sm:$0xff] %vm67, %v65
    // Predicated region
    $region10: #{tpu_custom_call.1} parent=1 // pred_check
      _
    $region11: #{tpu_custom_call.1} parent=1 // pred_check_branch
      %71 = sbr.rel (0) target = $region13
    $region12: #{tpu_custom_call.1} parent=1 // pred_region
      %73 = vsyncadd [#allocation3], 0
      %s74 = sshll.u32 [#allocation2], 4
      %s75 = int_to_ptr.vmem [resolvable:$true] %s74
      %s76 = sshll.u32 %s2, 4
      %s77 = int_to_ptr.hbm [resolvable:$true] %s76
      %82 = dma.vmem_to_hbm [thread:$0]  %s75, 256, %s77, [#allocation3], 128, 128, 8
    $region13: #{tpu_custom_call.1} parent=1 // pred_fallthru
      _
    // Predicated region
    $region14: #{tpu_custom_call.1} parent=1 // pred_check
      _
    $region15: #{tpu_custom_call.1} parent=1 // pred_check_branch
      %84 = sbr.rel (0) target = $region17
    $region16: #{tpu_custom_call.1} parent=1 // pred_region
      %86 = dma.done [#allocation3], 256
    $region17: #{tpu_custom_call.1} parent=1 // pred_fallthru
      _
    %87 = vsyncpa [#allocation3], 1

</llo_original>
